<compile_context>
chip_gen: v6e
topology: v6e:2x2x1
jax: 0.10.0
libtpu: 0.0.40
codegen_flags: <defaults>
</compile_context>

<pallas_src>
import jax
import jax.numpy as jnp
from jax.experimental import pallas as pl
from jax.experimental.pallas import tpu as pltpu


def _round_up(n, m):
    return -(-n // m) * m


def _pad_feat(n):
    # Tiny feature dims (<=8) pad to 8 sublanes; hidden dims pad to a multiple of 64.
    return 8 if n <= 8 else _round_up(n, 64)


def _make_mlp_kernel(num_layers, act_dtype):
    """Fused MLP on one batch tile.

    Activations: (features_pad, TILE_B) with batch on the lane axis.
    Weights: (out_pad, in_pad) with the bias folded into column `fan_in`
    (multiplied by a constant-1 activation row carried through the padding).
    Matmuls on the MXU with f32 accumulation; ReLU on the VPU in act_dtype.
    """

    def kernel(x_ref, *refs):
        *w_refs, o_ref = refs
        h = x_ref[...]                          # (in_pad, TILE_B)
        for l, w_ref in enumerate(w_refs):
            acc = jnp.dot(w_ref[...], h.astype(w_ref.dtype),
                          preferred_element_type=jnp.float32)
            if l < num_layers - 1:
                # Downcast first so ReLU runs on packed vregs where the VPU
                # supports it; max-with-0 commutes with the downcast.
                h = jnp.maximum(acc.astype(act_dtype), 0)
            else:
                h = acc
        o_ref[...] = h.astype(o_ref.dtype)

    return kernel


def _pack_weights(params, compute_dtype):
    """Zero-pad PyTorch (out,in) weights and fold the biases in.

    Column `fan_in` of each padded weight multiplies the constant-1 activation
    row and therefore carries the bias; entry (fan_out, fan_in) of every
    non-final layer is 1.0 so the next layer sees the constant-1 row again
    (ReLU(1) = 1 preserves it through the activation).
    """
    packed = []
    n = len(params)
    for idx, (w, b) in enumerate(params):
        o, i_ = w.shape
        o_p, i_p = _pad_feat(o), _pad_feat(i_)
        assert i_ < i_p, "bias fold needs a spare padded input row"
        wp = jnp.zeros((o_p, i_p), jnp.float32)
        wp = wp.at[:o, :i_].set(w)
        wp = wp.at[:o, i_].set(b)               # bias column
        if idx < n - 1:
            assert o < o_p, "bias fold needs a spare padded output row"
            wp = wp.at[o, i_].set(1.0)          # regenerate the constant-1 row
        packed.append(wp.astype(compute_dtype))
    return packed


def generator_forward(x, params, *, max_tile_b=8192, compute_dtype=jnp.bfloat16):
    """x: (B, 2) float32. params: list of PyTorch-style (W:(out,in), b:(out,))."""
    B, f_in = x.shape
    assert f_in == params[0][0].shape[1]
    f_out = params[-1][0].shape[0]
    num_layers = len(params)

    # --- chip-specific knobs -------------------------------------------------
    try:
        dk = jax.devices()[0].device_kind.lower()
    except Exception:
        dk = ""
    is_v7 = ("v7" in dk) or ("tpu7" in dk)
    has_bf16_vpu = "v5" not in dk                      # v5e VPU has no bf16 ALU
    act_dtype = compute_dtype if (has_bf16_vpu and compute_dtype == jnp.bfloat16) \
        else jnp.float32

    # --- batch tiling --------------------------------------------------------
    b128 = _round_up(B, 128)
    tile_b = min(max_tile_b, b128)
    if is_v7 and b128 >= 256:
        # Ensure >=2 grid steps so CORE_PARALLEL can shard across both TCs.
        tile_b = min(tile_b, _round_up(pl.cdiv(b128, 2), 128))
    b_pad = _round_up(B, tile_b)
    grid_steps = b_pad // tile_b

    # --- wrapper-side layout plumbing (all XLA, not in-kernel): transpose so
    #     batch is on the lane axis, zero-pad, append the constant-1 row used
    #     by the bias fold, pre-cast to the compute dtype. ---------------------
    in_pad0 = _pad_feat(f_in)
    xt = jnp.zeros((in_pad0, b_pad), jnp.float32)
    xt = xt.at[:f_in, :B].set(x.T)
    xt = xt.at[f_in, :].set(1.0)
    xt = xt.astype(compute_dtype)

    weights = _pack_weights(params, compute_dtype)
    out_pad = _pad_feat(f_out)

    in_specs = [pl.BlockSpec((in_pad0, tile_b), lambda i: (0, i))]
    for wp in weights:
        # Constant index_map -> weight stays resident in VMEM across grid steps.
        in_specs.append(pl.BlockSpec(wp.shape, lambda i: (0, 0)))

    if is_v7 and grid_steps >= 2:
        dim_sem = (pltpu.CORE_PARALLEL,)   # actually shard batch tiles over 2 TCs
    else:
        dim_sem = ("parallel",)

    out = pl.pallas_call(
        _make_mlp_kernel(num_layers, act_dtype),
        out_shape=jax.ShapeDtypeStruct((out_pad, b_pad), jnp.float32),
        grid=(grid_steps,),
        in_specs=in_specs,
        out_specs=pl.BlockSpec((out_pad, tile_b), lambda i: (0, i)),
        compiler_params=pltpu.CompilerParams(
            dimension_semantics=dim_sem,
            vmem_limit_bytes=32 * 1024 * 1024),
    )(xt, *weights)

    # Strip feature/batch padding and return the PyTorch (B, f_out) layout.
    return out[:f_out, :B].T


def init_params(key):
    """Deterministic init mimicking PyTorch's default Linear init
    (uniform(-1/sqrt(fan_in), 1/sqrt(fan_in))), PyTorch (out, in) layout."""
    dims = [(50, 2), (50, 50), (50, 50), (50, 50), (2, 50)]   # (out, in)
    params = []
    for (fan_out, fan_in) in dims:
        key, kw, kb = jax.random.split(key, 3)
        bound = 1.0 / jnp.sqrt(jnp.float32(fan_in))
        w = jax.random.uniform(kw, (fan_out, fan_in), jnp.float32, -bound, bound)
        b = jax.random.uniform(kb, (fan_out,), jnp.float32, -bound, bound)
        params.append((w, b))
    return params


def reference_forward(x, params):
    """Pure-f32 reference (PyTorch semantics: x @ W.T + b)."""
    h = x
    for i, (w, b) in enumerate(params):
        h = h @ w.T + b
        if i < len(params) - 1:
            h = jnp.maximum(h, 0.0)
    return h


def reference_forward_bf16(x, params):
    """Reference mirroring the kernel numerics: bf16 matmul inputs, bias folded
    into the bf16 weight via an augmented constant-1 column, f32 accumulation,
    ReLU applied to the bf16-rounded activation."""
    h = x.astype(jnp.bfloat16)
    n = len(params)
    for i, (w, b) in enumerate(params):
        w_aug = jnp.concatenate([w, b[:, None]], axis=1).astype(jnp.bfloat16)
        ones = jnp.ones((h.shape[0], 1), h.dtype)
        h_aug = jnp.concatenate([h, ones], axis=1)
        h = jnp.dot(h_aug, w_aug.T, preferred_element_type=jnp.float32)
        if i < n - 1:
            h = jnp.maximum(h.astype(jnp.bfloat16), 0)
    return h


if __name__ == "__main__":
    key = jax.random.PRNGKey(0)
    key, kx = jax.random.split(key)

    B = 8  # small batch
    x = jax.random.normal(kx, (B, 2), jnp.float32)
    params = init_params(key)

    out = jax.block_until_ready(generator_forward(x, params))
    assert out.shape == (B, 2), out.shape

    ref_bf16 = reference_forward_bf16(x, params)
    ref_f32 = reference_forward(x, params)
    assert jnp.allclose(out, ref_bf16, atol=3e-3, rtol=3e-3), (out, ref_bf16)
    assert jnp.allclose(out, ref_f32, atol=5e-2, rtol=5e-2), (out, ref_f32)

    # Also exercise the multi-step grid path with a non-multiple-of-tile batch.
    B2 = 300
    key, kx2 = jax.random.split(key)
    x2 = jax.random.normal(kx2, (B2, 2), jnp.float32)
    out2 = jax.block_until_ready(generator_forward(x2, params, max_tile_b=256))
    ref2 = reference_forward_bf16(x2, params)
    assert out2.shape == (B2, 2), out2.shape
    assert jnp.allclose(out2, ref2, atol=3e-3, rtol=3e-3), (out2, ref2)

    print("KERNEL_OK")
</pallas_src>

<mosaic_0001>
module attributes {stable_mosaic.version = 11 : i64} {
  func.func @kernel(%arg0: i32, %arg1: memref<8x128xbf16, #tpu.memory_space<vmem>>, %arg2: memref<64x8xbf16, #tpu.memory_space<vmem>>, %arg3: memref<64x64xbf16, #tpu.memory_space<vmem>>, %arg4: memref<64x64xbf16, #tpu.memory_space<vmem>>, %arg5: memref<64x64xbf16, #tpu.memory_space<vmem>>, %arg6: memref<8x64xbf16, #tpu.memory_space<vmem>>, %arg7: memref<8x128xf32, #tpu.memory_space<vmem>>) attributes {dimension_semantics = [#tpu.dimension_semantics<parallel>], iteration_bounds = array<i64: 1>, scalar_prefetch = 0 : i64, scratch_operands = 0 : i64, tpu.core_type = #tpu.core_type<tc>, window_params = [{transform_indices = @transform_0, window_bounds = array<i64: 8, 128>}, {pipeline_mode = #tpu.pipeline_mode<synchronous>, transform_indices = @transform_1, window_bounds = array<i64: 64, 8>}, {pipeline_mode = #tpu.pipeline_mode<synchronous>, transform_indices = @transform_2, window_bounds = array<i64: 64, 64>}, {pipeline_mode = #tpu.pipeline_mode<synchronous>, transform_indices = @transform_3, window_bounds = array<i64: 64, 64>}, {pipeline_mode = #tpu.pipeline_mode<synchronous>, transform_indices = @transform_4, window_bounds = array<i64: 64, 64>}, {pipeline_mode = #tpu.pipeline_mode<synchronous>, transform_indices = @transform_5, window_bounds = array<i64: 8, 64>}, {transform_indices = @transform_6, window_bounds = array<i64: 8, 128>}]} {
    %c0 = arith.constant 0 : index
    %c0_0 = arith.constant 0 : index
    %0 = vector.load %arg1[%c0, %c0_0] : memref<8x128xbf16, #tpu.memory_space<vmem>>, vector<8x128xbf16>
    %c0_1 = arith.constant 0 : index
    %c0_2 = arith.constant 0 : index
    %1 = vector.load %arg2[%c0_1, %c0_2] : memref<64x8xbf16, #tpu.memory_space<vmem>>, vector<64x8xbf16>
    %cst = arith.constant dense<0.000000e+00> : vector<64x128xf32>
    %2 = tpu.matmul %1, %0, %cst {dimension_numbers = #tpu.dot_dimension_numbers<[1], [0], [0], [1], [0, 0, 1, 1], [], []>} : vector<64x8xbf16>, vector<8x128xbf16>, vector<64x128xf32> -> vector<64x128xf32>
    %3 = arith.truncf %2 : vector<64x128xf32> to vector<64x128xbf16>
    %cst_3 = arith.constant 0.000000e+00 : bf16
    %4 = vector.broadcast %cst_3 : bf16 to vector<64x128xbf16>
    %5 = arith.maximumf %3, %4 : vector<64x128xbf16>
    %c0_4 = arith.constant 0 : index
    %c0_5 = arith.constant 0 : index
    %6 = vector.load %arg3[%c0_4, %c0_5] : memref<64x64xbf16, #tpu.memory_space<vmem>>, vector<64x64xbf16>
    %cst_6 = arith.constant dense<0.000000e+00> : vector<64x128xf32>
    %7 = tpu.matmul %6, %5, %cst_6 {dimension_numbers = #tpu.dot_dimension_numbers<[1], [0], [0], [1], [0, 0, 1, 1], [], []>} : vector<64x64xbf16>, vector<64x128xbf16>, vector<64x128xf32> -> vector<64x128xf32>
    %8 = arith.truncf %7 : vector<64x128xf32> to vector<64x128xbf16>
    %cst_7 = arith.constant 0.000000e+00 : bf16
    %9 = vector.broadcast %cst_7 : bf16 to vector<64x128xbf16>
    %10 = arith.maximumf %8, %9 : vector<64x128xbf16>
    %c0_8 = arith.constant 0 : index
    %c0_9 = arith.constant 0 : index
    %11 = vector.load %arg4[%c0_8, %c0_9] : memref<64x64xbf16, #tpu.memory_space<vmem>>, vector<64x64xbf16>
    %cst_10 = arith.constant dense<0.000000e+00> : vector<64x128xf32>
    %12 = tpu.matmul %11, %10, %cst_10 {dimension_numbers = #tpu.dot_dimension_numbers<[1], [0], [0], [1], [0, 0, 1, 1], [], []>} : vector<64x64xbf16>, vector<64x128xbf16>, vector<64x128xf32> -> vector<64x128xf32>
    %13 = arith.truncf %12 : vector<64x128xf32> to vector<64x128xbf16>
    %cst_11 = arith.constant 0.000000e+00 : bf16
    %14 = vector.broadcast %cst_11 : bf16 to vector<64x128xbf16>
    %15 = arith.maximumf %13, %14 : vector<64x128xbf16>
    %c0_12 = arith.constant 0 : index
    %c0_13 = arith.constant 0 : index
    %16 = vector.load %arg5[%c0_12, %c0_13] : memref<64x64xbf16, #tpu.memory_space<vmem>>, vector<64x64xbf16>
    %cst_14 = arith.constant dense<0.000000e+00> : vector<64x128xf32>
    %17 = tpu.matmul %16, %15, %cst_14 {dimension_numbers = #tpu.dot_dimension_numbers<[1], [0], [0], [1], [0, 0, 1, 1], [], []>} : vector<64x64xbf16>, vector<64x128xbf16>, vector<64x128xf32> -> vector<64x128xf32>
    %18 = arith.truncf %17 : vector<64x128xf32> to vector<64x128xbf16>
    %cst_15 = arith.constant 0.000000e+00 : bf16
    %19 = vector.broadcast %cst_15 : bf16 to vector<64x128xbf16>
    %20 = arith.maximumf %18, %19 : vector<64x128xbf16>
    %c0_16 = arith.constant 0 : index
    %c0_17 = arith.constant 0 : index
    %21 = vector.load %arg6[%c0_16, %c0_17] : memref<8x64xbf16, #tpu.memory_space<vmem>>, vector<8x64xbf16>
    %cst_18 = arith.constant dense<0.000000e+00> : vector<8x128xf32>
    %22 = tpu.matmul %21, %20, %cst_18 {dimension_numbers = #tpu.dot_dimension_numbers<[1], [0], [0], [1], [0, 0, 1, 1], [], []>} : vector<8x64xbf16>, vector<64x128xbf16>, vector<8x128xf32> -> vector<8x128xf32>
    %c0_19 = arith.constant 0 : index
    %c0_20 = arith.constant 0 : index
    %23 = vector.load %arg7[%c0_19, %c0_20] : memref<8x128xf32, #tpu.memory_space<vmem>>, vector<8x128xf32>
    tpu.vector_store %arg7[%c0_19, %c0_20], %22 {strides = array<i32>} : memref<8x128xf32, #tpu.memory_space<vmem>>, vector<8x128xf32>,
    return
  }
  func.func @transform_0(%arg0: i32) -> (i32, i32) {
    %c0_i32 = arith.constant 0 : i32
    %c0_i32_0 = arith.constant 0 : i32
    return %c0_i32, %arg0 : i32, i32
  }
  func.func @transform_1(%arg0: i32) -> (i32, i32) {
    %c0_i32 = arith.constant 0 : i32
    %c0_i32_0 = arith.constant 0 : i32
    %c0_i32_1 = arith.constant 0 : i32
    return %c0_i32, %c0_i32_0 : i32, i32
  }
  func.func @transform_2(%arg0: i32) -> (i32, i32) {
    %c0_i32 = arith.constant 0 : i32
    %c0_i32_0 = arith.constant 0 : i32
    %c0_i32_1 = arith.constant 0 : i32
    return %c0_i32, %c0_i32_0 : i32, i32
  }
  func.func @transform_3(%arg0: i32) -> (i32, i32) {
    %c0_i32 = arith.constant 0 : i32
    %c0_i32_0 = arith.constant 0 : i32
    %c0_i32_1 = arith.constant 0 : i32
    return %c0_i32, %c0_i32_0 : i32, i32
  }
  func.func @transform_4(%arg0: i32) -> (i32, i32) {
    %c0_i32 = arith.constant 0 : i32
    %c0_i32_0 = arith.constant 0 : i32
    %c0_i32_1 = arith.constant 0 : i32
    return %c0_i32, %c0_i32_0 : i32, i32
  }
  func.func @transform_5(%arg0: i32) -> (i32, i32) {
    %c0_i32 = arith.constant 0 : i32
    %c0_i32_0 = arith.constant 0 : i32
    %c0_i32_1 = arith.constant 0 : i32
    return %c0_i32, %c0_i32_0 : i32, i32
  }
  func.func @transform_6(%arg0: i32) -> (i32, i32) {
    %c0_i32 = arith.constant 0 : i32
    %c0_i32_0 = arith.constant 0 : i32
    return %c0_i32, %arg0 : i32, i32
  }
}

</mosaic_0001>

<llo_original>
// kernel: tpu_custom_call.1
$region0: #{tpu_custom_call.1}
  #allocation0 [shape = 'u32[]', space=smem, size = 0x4, offset = 0x4, fixed_abs, tag = 'smem constant byte address 0x4 - core index']
  #allocation1 [shape = 'u32[144,128]{1,0:T(1,128)}', space=vmem, size = 0x12000, scoped, tag = 'internal scratch']
  %s0 = inlined_call_operand.vmem [shape: bf16[8,128], index: 0, kind: input, shape index: {}]
  %s1 = inlined_call_operand.vmem [shape: bf16[64,8], index: 1, kind: input, shape index: {}]
  %s2 = inlined_call_operand.vmem [shape: bf16[64,64], index: 2, kind: input, shape index: {}]
  %s3 = inlined_call_operand.hbm [shape: bf16[64,64], index: 3, kind: input, shape index: {}]
  %s4 = inlined_call_operand.hbm [shape: bf16[64,64], index: 4, kind: input, shape index: {}]
  %s5 = inlined_call_operand.vmem [shape: bf16[8,64], index: 5, kind: input, shape index: {}]
  %s6 = inlined_call_operand.hbm [shape: f32[8,128], index: 6, kind: output, shape index: {}]
  %s7 = sld [smem:[#allocation0]]
  $region42: #{tpu_custom_call.1} parent=0
    _
  %s9 = ssub.s32 1, %s7
  %s10 = scalar_select 0, %s9, %s7
  $region1: #{tpu_custom_call.1} parent=0
    #allocation2 [shape = 'u8[16384]{0}', space=vmem, size = 0x4000, scoped, tag = 'input window, operand 3, single buffered']
    #allocation3 [shape = 's32[1]{0}', space=sflag, size = 0x4, scoped, tag = 'scoped memory for tpu_custom_call.1']
    #allocation4 [shape = 's32[1]{0}', space=sflag, size = 0x4, scoped, tag = 'scoped memory for tpu_custom_call.1']
    #allocation5 [shape = 'u8[16384]{0}', space=vmem, size = 0x4000, scoped, tag = 'input window, operand 4, single buffered']
    #allocation6 [shape = 's32[1]{0}', space=sflag, size = 0x4, scoped, tag = 'scoped memory for tpu_custom_call.1']
    #allocation7 [shape = 'u8[4096]{0}', space=vmem, size = 0x1000, scoped, tag = 'output window, operand 0, single buffered']
    %11 = vsyncpa [#allocation3], 0
    %12 = vsyncpa [#allocation6], 0
    %13 = vsyncpa [#allocation4], 0
    // Predicated region
    $region2: #{tpu_custom_call.1} parent=1 // pred_check
      _
    $region3: #{tpu_custom_call.1} parent=1 // pred_check_branch
      %15 = sbr.rel (0) target = $region5
    $region4: #{tpu_custom_call.1} parent=1 // pred_region
      _
    $region5: #{tpu_custom_call.1} parent=1 // pred_fallthru
      _
    // Predicated region
    $region6: #{tpu_custom_call.1} parent=1 // pred_check
      _
    $region7: #{tpu_custom_call.1} parent=1 // pred_check_branch
      %17 = sbr.rel (0) target = $region9
    $region8: #{tpu_custom_call.1} parent=1 // pred_region
      _
    $region9: #{tpu_custom_call.1} parent=1 // pred_fallthru
      _
    // Predicated region
    $region10: #{tpu_custom_call.1} parent=1 // pred_check
      _
    $region11: #{tpu_custom_call.1} parent=1 // pred_check_branch
      %19 = sbr.rel (0) target = $region13
    $region12: #{tpu_custom_call.1} parent=1 // pred_region
      _
    $region13: #{tpu_custom_call.1} parent=1 // pred_fallthru
      _
    // Predicated region
    $region14: #{tpu_custom_call.1} parent=1 // pred_check
      _
    $region15: #{tpu_custom_call.1} parent=1 // pred_check_branch
      %21 = sbr.rel (0) target = $region17
    $region16: #{tpu_custom_call.1} parent=1 // pred_region
      %s23 = ssub.s32 512, 512
      %24 = vsyncadd [#allocation3], %s23
      %s25 = sshll.u32 [#allocation2], 4
      %s26 = int_to_ptr.vmem [resolvable:$true] %s25
      %31 = dma.hbm_to_vmem [thread:$0]  %s3, 512, %s26, [#allocation3], 64, 64, 4
    $region17: #{tpu_custom_call.1} parent=1 // pred_fallthru
      _
    // Predicated region
    $region18: #{tpu_custom_call.1} parent=1 // pred_check
      _
    $region19: #{tpu_custom_call.1} parent=1 // pred_check_branch
      %33 = sbr.rel (0) target = $region21
    $region20: #{tpu_custom_call.1} parent=1 // pred_region
      %s35 = ssub.s32 512, 512
      %36 = vsyncadd [#allocation6], %s35
      %s37 = sshll.u32 [#allocation5], 4
      %s38 = int_to_ptr.vmem [resolvable:$true] %s37
      %43 = dma.hbm_to_vmem [thread:$0]  %s4, 512, %s38, [#allocation6], 64, 64, 4
    $region21: #{tpu_custom_call.1} parent=1 // pred_fallthru
      _
    // Predicated region
    $region22: #{tpu_custom_call.1} parent=1 // pred_check
      _
    $region23: #{tpu_custom_call.1} parent=1 // pred_check_branch
      %45 = sbr.rel (0) target = $region25
    $region24: #{tpu_custom_call.1} parent=1 // pred_region
      _
    $region25: #{tpu_custom_call.1} parent=1 // pred_fallthru
      _
    // Predicated region
    $region26: #{tpu_custom_call.1} parent=1 // pred_check
      _
    $region27: #{tpu_custom_call.1} parent=1 // pred_check_branch
      %47 = sbr.rel (0) target = $region29
    $region28: #{tpu_custom_call.1} parent=1 // pred_region
      %48 = dma.done [#allocation3], 512
    $region29: #{tpu_custom_call.1} parent=1 // pred_fallthru
      _
    // Predicated region
    $region30: #{tpu_custom_call.1} parent=1 // pred_check
      _
    $region31: #{tpu_custom_call.1} parent=1 // pred_check_branch
      %50 = sbr.rel (0) target = $region33
    $region32: #{tpu_custom_call.1} parent=1 // pred_region
      %51 = dma.done [#allocation6], 512
    $region33: #{tpu_custom_call.1} parent=1 // pred_fallthru
      _
    %v53 = vld [vmem:[%s0] sm:$0xf]
    %v54 = vld [vmem:[%s1] sm:$0xf]
    %v55 = vld [vmem:[%s1 + $0x4] sm:$0xf]
    %v56 = vld [vmem:[%s1 + $0x8] sm:$0xf]
    %v57 = vld [vmem:[%s1 + $0xc] sm:$0xf]
    %v58 = vld [vmem:[%s1 + $0x10] sm:$0xf]
    %v59 = vld [vmem:[%s1 + $0x14] sm:$0xf]
    %v60 = vld [vmem:[%s1 + $0x18] sm:$0xf]
    %v61 = vld [vmem:[%s1 + $0x1c] sm:$0xf]
    %v70 = vunpack.c.l.b16 %v54
    %v71 = vunpack.c.l.b16 %v55
    %v72 = vunpack.c.l.b16 %v56
    %v73 = vunpack.c.l.b16 %v57
    %v74 = vunpack.c.l.b16 %v58
    %v75 = vunpack.c.l.b16 %v59
    %v76 = vunpack.c.l.b16 %v60
    %v77 = vunpack.c.l.b16 %v61
    %v78 = vpack.c.b16 %v71, %v70
    %v79 = vpack.c.b16 %v73, %v72
    %v80 = vpack.c.b16 %v75, %v74
    %v81 = vpack.c.b16 %v77, %v76
    %vm82 = vcmask 64512
    %v84 = vsel %vm82, %v78, 0
    %v87 = vsel %vm82, %v79, 0
    %v90 = vsel %vm82, %v80, 0
    %v93 = vsel %vm82, %v81, 0
    %vm95 = vcmask 1043456
    %v97 = vsel %vm95, %v53, 0
    %99 = vmatprep.subr.bf16.mxu0 0
    %100 = vmatpush1.bf16.msra.mxu0 0
    %101 = vmatprep.subr.bf16.mxu0 0
    %102 = vmatpush1.bf16.msra.mxu0 0
    %103 = vmatprep.subr.bf16.mxu0 0
    %104 = vmatpush1.bf16.msra.mxu0 0
    %105 = vmatprep.subr.bf16.mxu0 0
    %106 = vmatpush1.bf16.msra.mxu0 0
    %107 = vmatprep.subr.bf16.mxu0 0
    %108 = vmatpush1.bf16.msra.mxu0 0
    %109 = vmatprep.subr.bf16.mxu0 0
    %110 = vmatpush1.bf16.msra.mxu0 0
    %111 = vmatprep.subr.bf16.mxu0 0
    %112 = vmatpush1.bf16.msra.mxu0 0
    %113 = vmatprep.subr.bf16.mxu0 0
    %114 = vmatpush1.bf16.msra.mxu0 %v97
    %115 = vmatprep.subr.bf16.mxu0 0
    %116 = vmatpush2.bf16.msra.mxu0 0
    %117 = vmatprep.subr.bf16.mxu0 0
    %118 = vmatpush2.bf16.msra.mxu0 0
    %119 = vmatprep.subr.bf16.mxu0 0
    %120 = vmatpush2.bf16.msra.mxu0 0
    %121 = vmatprep.subr.bf16.mxu0 0
    %122 = vmatpush2.bf16.msra.mxu0 0
    %123 = vmatprep.subr.bf16.mxu0 0
    %124 = vmatpush2.bf16.msra.mxu0 0
    %125 = vmatprep.subr.bf16.mxu0 0
    %126 = vmatpush2.bf16.msra.mxu0 0
    %127 = vmatprep.subr.bf16.mxu0 0
    %128 = vmatpush2.bf16.msra.mxu0 0
    %129 = vmatprep.subr.bf16.mxu0 0
    %130 = vmatpush2.bf16.msra.mxu0 0
    %131 = vmatprep.mubr.bf16.mxu0 0
    %132 = vmatmul.mubr.bf16.gmra.mxu0 %v84
    %v133 = vpop.f32.mrf.mxu0
    %v134 = vadd.f32 0.0, %v133
    %v135 = vpop.f32.mrf.mxu0
    %v136 = vpop.f32.mrf.mxu0
    %v137 = vadd.f32 0.0, %v136
    %v138 = vpop.f32.mrf.mxu0
    %139 = vmatprep.mubr.bf16.mxu0 0
    %140 = vmatmul.mubr.bf16.gmra.mxu0 %v87
    %v141 = vpop.f32.mrf.mxu0
    %v142 = vadd.f32 0.0, %v141
    %v143 = vpop.f32.mrf.mxu0
    %v144 = vpop.f32.mrf.mxu0
    %v145 = vadd.f32 0.0, %v144
    %v146 = vpop.f32.mrf.mxu0
    %147 = vmatprep.mubr.bf16.mxu0 0
    %148 = vmatmul.mubr.bf16.gmra.mxu0 %v90
    %v149 = vpop.f32.mrf.mxu0
    %v150 = vadd.f32 0.0, %v149
    %v151 = vpop.f32.mrf.mxu0
    %v152 = vpop.f32.mrf.mxu0
    %v153 = vadd.f32 0.0, %v152
    %v154 = vpop.f32.mrf.mxu0
    %155 = vmatprep.mubr.bf16.mxu0 0
    %156 = vmatmul.mubr.bf16.gmra.mxu0 %v93
    %v157 = vpop.f32.mrf.mxu0
    %v158 = vadd.f32 0.0, %v157
    %v159 = vpop.f32.mrf.mxu0
    %v160 = vpop.f32.mrf.mxu0
    %v161 = vadd.f32 0.0, %v160
    %v162 = vpop.f32.mrf.mxu0
    %163 = vdwg.mxu0
    %v164 = vpack.c.bf16 %v137, %v134
    %v165 = vpack.c.bf16 %v145, %v142
    %v166 = vpack.c.bf16 %v153, %v150
    %v167 = vpack.c.bf16 %v161, %v158
    %v168 = vmax.bf16 %v164, 0
    %v169 = vmax.bf16 %v165, 0
    %v170 = vmax.bf16 %v166, 0
    %v171 = vmax.bf16 %v167, 0
    %v172 = vld [vmem:[%s2] sm:$0xf]
    %v173 = vld [vmem:[%s2 + $0x4] sm:$0xf]
    %v174 = vld [vmem:[%s2 + $0x8] sm:$0xf]
    %v175 = vld [vmem:[%s2 + $0xc] sm:$0xf]
    %v176 = vld [vmem:[%s2 + $0x10] sm:$0xf]
    %v177 = vld [vmem:[%s2 + $0x14] sm:$0xf]
    %v178 = vld [vmem:[%s2 + $0x18] sm:$0xf]
    %v179 = vld [vmem:[%s2 + $0x1c] sm:$0xf]
    %v188 = vunpack.c.l.b16 %v172
    %v189 = vunpack.c.l.b16 %v173
    %v190 = vunpack.c.l.b16 %v174
    %v191 = vunpack.c.l.b16 %v175
    %v192 = vunpack.c.l.b16 %v176
    %v193 = vunpack.c.l.b16 %v177
    %v194 = vunpack.c.l.b16 %v178
    %v195 = vunpack.c.l.b16 %v179
    %v196 = vpack.c.b16 %v189, %v188
    %v197 = vpack.c.b16 %v191, %v190
    %v198 = vpack.c.b16 %v193, %v192
    %v199 = vpack.c.b16 %v195, %v194
    %vm200 = vcmask 523264
    %v202 = vsel %vm200, %v196, 0
    %v205 = vsel %vm200, %v197, 0
    %v208 = vsel %vm200, %v198, 0
    %v211 = vsel %vm200, %v199, 0
    %213 = vmatprep.subr.bf16.mxu0 0
    %214 = vmatpush1.bf16.msra.mxu0 0
    %215 = vmatprep.subr.bf16.mxu0 0
    %216 = vmatpush1.bf16.msra.mxu0 0
    %217 = vmatprep.subr.bf16.mxu0 0
    %218 = vmatpush1.bf16.msra.mxu0 0
    %219 = vmatprep.subr.bf16.mxu0 0
    %220 = vmatpush1.bf16.msra.mxu0 0
    %221 = vmatprep.subr.bf16.mxu0 0
    %222 = vmatpush1.bf16.msra.mxu0 %v171
    %223 = vmatprep.subr.bf16.mxu0 0
    %224 = vmatpush1.bf16.msra.mxu0 %v170
    %225 = vmatprep.subr.bf16.mxu0 0
    %226 = vmatpush1.bf16.msra.mxu0 %v169
    %227 = vmatprep.subr.bf16.mxu0 0
    %228 = vmatpush1.bf16.msra.mxu0 %v168
    %229 = vmatprep.subr.bf16.mxu0 0
    %230 = vmatpush2.bf16.msra.mxu0 0
    %231 = vmatprep.subr.bf16.mxu0 0
    %232 = vmatpush2.bf16.msra.mxu0 0
    %233 = vmatprep.subr.bf16.mxu0 0
    %234 = vmatpush2.bf16.msra.mxu0 0
    %235 = vmatprep.subr.bf16.mxu0 0
    %236 = vmatpush2.bf16.msra.mxu0 0
    %237 = vmatprep.subr.bf16.mxu0 0
    %238 = vmatpush2.bf16.msra.mxu0 0
    %239 = vmatprep.subr.bf16.mxu0 0
    %240 = vmatpush2.bf16.msra.mxu0 0
    %241 = vmatprep.subr.bf16.mxu0 0
    %242 = vmatpush2.bf16.msra.mxu0 0
    %243 = vmatprep.subr.bf16.mxu0 0
    %244 = vmatpush2.bf16.msra.mxu0 0
    %245 = vmatprep.mubr.bf16.mxu0 0
    %246 = vmatmul.mubr.bf16.gmra.mxu0 %v202
    %v247 = vpop.f32.mrf.mxu0
    %v248 = vadd.f32 0.0, %v247
    %v249 = vpop.f32.mrf.mxu0
    %v250 = vpop.f32.mrf.mxu0
    %v251 = vadd.f32 0.0, %v250
    %v252 = vpop.f32.mrf.mxu0
    %253 = vmatprep.mubr.bf16.mxu0 0
    %254 = vmatmul.mubr.bf16.gmra.mxu0 %v205
    %v255 = vpop.f32.mrf.mxu0
    %v256 = vadd.f32 0.0, %v255
    %v257 = vpop.f32.mrf.mxu0
    %v258 = vpop.f32.mrf.mxu0
    %v259 = vadd.f32 0.0, %v258
    %v260 = vpop.f32.mrf.mxu0
    %261 = vmatprep.mubr.bf16.mxu0 0
    %262 = vmatmul.mubr.bf16.gmra.mxu0 %v208
    %v263 = vpop.f32.mrf.mxu0
    %v264 = vadd.f32 0.0, %v263
    %v265 = vpop.f32.mrf.mxu0
    %v266 = vpop.f32.mrf.mxu0
    %v267 = vadd.f32 0.0, %v266
    %v268 = vpop.f32.mrf.mxu0
    %269 = vmatprep.mubr.bf16.mxu0 0
    %270 = vmatmul.mubr.bf16.gmra.mxu0 %v211
    %v271 = vpop.f32.mrf.mxu0
    %v272 = vadd.f32 0.0, %v271
    %v273 = vpop.f32.mrf.mxu0
    %v274 = vpop.f32.mrf.mxu0
    %v275 = vadd.f32 0.0, %v274
    %v276 = vpop.f32.mrf.mxu0
    %277 = vdwg.mxu0
    %v278 = vpack.c.bf16 %v251, %v248
    %v279 = vpack.c.bf16 %v259, %v256
    %v280 = vpack.c.bf16 %v267, %v264
    %v281 = vpack.c.bf16 %v275, %v272
    %v282 = vmax.bf16 %v278, 0
    %v283 = vmax.bf16 %v279, 0
    %v284 = vmax.bf16 %v280, 0
    %v285 = vmax.bf16 %v281, 0
    %v286 = vld [vmem:[#allocation2] sm:$0xf]
    %v287 = vld [vmem:[#allocation2 + $0x4] sm:$0xf]
    %v288 = vld [vmem:[#allocation2 + $0x8] sm:$0xf]
    %v289 = vld [vmem:[#allocation2 + $0xc] sm:$0xf]
    %v290 = vld [vmem:[#allocation2 + $0x10] sm:$0xf]
    %v291 = vld [vmem:[#allocation2 + $0x14] sm:$0xf]
    %v292 = vld [vmem:[#allocation2 + $0x18] sm:$0xf]
    %v293 = vld [vmem:[#allocation2 + $0x1c] sm:$0xf]
    %v302 = vunpack.c.l.b16 %v286
    %v303 = vunpack.c.l.b16 %v287
    %v304 = vunpack.c.l.b16 %v288
    %v305 = vunpack.c.l.b16 %v289
    %v306 = vunpack.c.l.b16 %v290
    %v307 = vunpack.c.l.b16 %v291
    %v308 = vunpack.c.l.b16 %v292
    %v309 = vunpack.c.l.b16 %v293
    %v310 = vpack.c.b16 %v303, %v302
    %v311 = vpack.c.b16 %v305, %v304
    %v312 = vpack.c.b16 %v307, %v306
    %v313 = vpack.c.b16 %v309, %v308
    %v315 = vsel %vm200, %v310, 0
    %v318 = vsel %vm200, %v311, 0
    %v321 = vsel %vm200, %v312, 0
    %v324 = vsel %vm200, %v313, 0
    %326 = vmatprep.subr.bf16.mxu0 0
    %327 = vmatpush1.bf16.msra.mxu0 0
    %328 = vmatprep.subr.bf16.mxu0 0
    %329 = vmatpush1.bf16.msra.mxu0 0
    %330 = vmatprep.subr.bf16.mxu0 0
    %331 = vmatpush1.bf16.msra.mxu0 0
    %332 = vmatprep.subr.bf16.mxu0 0
    %333 = vmatpush1.bf16.msra.mxu0 0
    %334 = vmatprep.subr.bf16.mxu0 0
    %335 = vmatpush1.bf16.msra.mxu0 %v285
    %336 = vmatprep.subr.bf16.mxu0 0
    %337 = vmatpush1.bf16.msra.mxu0 %v284
    %338 = vmatprep.subr.bf16.mxu0 0
    %339 = vmatpush1.bf16.msra.mxu0 %v283
    %340 = vmatprep.subr.bf16.mxu0 0
    %341 = vmatpush1.bf16.msra.mxu0 %v282
    %342 = vmatprep.subr.bf16.mxu0 0
    %343 = vmatpush2.bf16.msra.mxu0 0
    %344 = vmatprep.subr.bf16.mxu0 0
    %345 = vmatpush2.bf16.msra.mxu0 0
    %346 = vmatprep.subr.bf16.mxu0 0
    %347 = vmatpush2.bf16.msra.mxu0 0
    %348 = vmatprep.subr.bf16.mxu0 0
    %349 = vmatpush2.bf16.msra.mxu0 0
    %350 = vmatprep.subr.bf16.mxu0 0
    %351 = vmatpush2.bf16.msra.mxu0 0
    %352 = vmatprep.subr.bf16.mxu0 0
    %353 = vmatpush2.bf16.msra.mxu0 0
    %354 = vmatprep.subr.bf16.mxu0 0
    %355 = vmatpush2.bf16.msra.mxu0 0
    %356 = vmatprep.subr.bf16.mxu0 0
    %357 = vmatpush2.bf16.msra.mxu0 0
    %358 = vmatprep.mubr.bf16.mxu0 0
    %359 = vmatmul.mubr.bf16.gmra.mxu0 %v315
    %v360 = vpop.f32.mrf.mxu0
    %v361 = vadd.f32 0.0, %v360
    %v362 = vpop.f32.mrf.mxu0
    %v363 = vpop.f32.mrf.mxu0
    %v364 = vadd.f32 0.0, %v363
    %v365 = vpop.f32.mrf.mxu0
    %366 = vmatprep.mubr.bf16.mxu0 0
    %367 = vmatmul.mubr.bf16.gmra.mxu0 %v318
    %v368 = vpop.f32.mrf.mxu0
    %v369 = vadd.f32 0.0, %v368
    %v370 = vpop.f32.mrf.mxu0
    %v371 = vpop.f32.mrf.mxu0
    %v372 = vadd.f32 0.0, %v371
    %v373 = vpop.f32.mrf.mxu0
    %374 = vmatprep.mubr.bf16.mxu0 0
    %375 = vmatmul.mubr.bf16.gmra.mxu0 %v321
    %v376 = vpop.f32.mrf.mxu0
    %v377 = vadd.f32 0.0, %v376
    %v378 = vpop.f32.mrf.mxu0
    %v379 = vpop.f32.mrf.mxu0
    %v380 = vadd.f32 0.0, %v379
    %v381 = vpop.f32.mrf.mxu0
    %382 = vmatprep.mubr.bf16.mxu0 0
    %383 = vmatmul.mubr.bf16.gmra.mxu0 %v324
    %v384 = vpop.f32.mrf.mxu0
    %v385 = vadd.f32 0.0, %v384
    %v386 = vpop.f32.mrf.mxu0
    %v387 = vpop.f32.mrf.mxu0
    %v388 = vadd.f32 0.0, %v387
    %v389 = vpop.f32.mrf.mxu0
    %390 = vdwg.mxu0
    %v391 = vpack.c.bf16 %v364, %v361
    %v392 = vpack.c.bf16 %v372, %v369
    %v393 = vpack.c.bf16 %v380, %v377
    %v394 = vpack.c.bf16 %v388, %v385
    %v395 = vmax.bf16 %v391, 0
    %v396 = vmax.bf16 %v392, 0
    %v397 = vmax.bf16 %v393, 0
    %v398 = vmax.bf16 %v394, 0
    %v399 = vld [vmem:[#allocation5] sm:$0xf]
    %v400 = vld [vmem:[#allocation5 + $0x4] sm:$0xf]
    %v401 = vld [vmem:[#allocation5 + $0x8] sm:$0xf]
    %v402 = vld [vmem:[#allocation5 + $0xc] sm:$0xf]
    %v403 = vld [vmem:[#allocation5 + $0x10] sm:$0xf]
    %v404 = vld [vmem:[#allocation5 + $0x14] sm:$0xf]
    %v405 = vld [vmem:[#allocation5 + $0x18] sm:$0xf]
    %v406 = vld [vmem:[#allocation5 + $0x1c] sm:$0xf]
    %v415 = vunpack.c.l.b16 %v399
    %v416 = vunpack.c.l.b16 %v400
    %v417 = vunpack.c.l.b16 %v401
    %v418 = vunpack.c.l.b16 %v402
    %v419 = vunpack.c.l.b16 %v403
    %v420 = vunpack.c.l.b16 %v404
    %v421 = vunpack.c.l.b16 %v405
    %v422 = vunpack.c.l.b16 %v406
    %v423 = vpack.c.b16 %v416, %v415
    %v424 = vpack.c.b16 %v418, %v417
    %v425 = vpack.c.b16 %v420, %v419
    %v426 = vpack.c.b16 %v422, %v421
    %v428 = vsel %vm200, %v423, 0
    %v431 = vsel %vm200, %v424, 0
    %v434 = vsel %vm200, %v425, 0
    %v437 = vsel %vm200, %v426, 0
    %439 = vmatprep.subr.bf16.mxu0 0
    %440 = vmatpush1.bf16.msra.mxu0 0
    %441 = vmatprep.subr.bf16.mxu0 0
    %442 = vmatpush1.bf16.msra.mxu0 0
    %443 = vmatprep.subr.bf16.mxu0 0
    %444 = vmatpush1.bf16.msra.mxu0 0
    %445 = vmatprep.subr.bf16.mxu0 0
    %446 = vmatpush1.bf16.msra.mxu0 0
    %447 = vmatprep.subr.bf16.mxu0 0
    %448 = vmatpush1.bf16.msra.mxu0 %v398
    %449 = vmatprep.subr.bf16.mxu0 0
    %450 = vmatpush1.bf16.msra.mxu0 %v397
    %451 = vmatprep.subr.bf16.mxu0 0
    %452 = vmatpush1.bf16.msra.mxu0 %v396
    %453 = vmatprep.subr.bf16.mxu0 0
    %454 = vmatpush1.bf16.msra.mxu0 %v395
    %455 = vmatprep.subr.bf16.mxu0 0
    %456 = vmatpush2.bf16.msra.mxu0 0
    %457 = vmatprep.subr.bf16.mxu0 0
    %458 = vmatpush2.bf16.msra.mxu0 0
    %459 = vmatprep.subr.bf16.mxu0 0
    %460 = vmatpush2.bf16.msra.mxu0 0
    %461 = vmatprep.subr.bf16.mxu0 0
    %462 = vmatpush2.bf16.msra.mxu0 0
    %463 = vmatprep.subr.bf16.mxu0 0
    %464 = vmatpush2.bf16.msra.mxu0 0
    %465 = vmatprep.subr.bf16.mxu0 0
    %466 = vmatpush2.bf16.msra.mxu0 0
    %467 = vmatprep.subr.bf16.mxu0 0
    %468 = vmatpush2.bf16.msra.mxu0 0
    %469 = vmatprep.subr.bf16.mxu0 0
    %470 = vmatpush2.bf16.msra.mxu0 0
    %471 = vmatprep.mubr.bf16.mxu0 0
    %472 = vmatmul.mubr.bf16.gmra.mxu0 %v428
    %v473 = vpop.f32.mrf.mxu0
    %v474 = vadd.f32 0.0, %v473
    %v475 = vpop.f32.mrf.mxu0
    %v476 = vpop.f32.mrf.mxu0
    %v477 = vadd.f32 0.0, %v476
    %v478 = vpop.f32.mrf.mxu0
    %479 = vmatprep.mubr.bf16.mxu0 0
    %480 = vmatmul.mubr.bf16.gmra.mxu0 %v431
    %v481 = vpop.f32.mrf.mxu0
    %v482 = vadd.f32 0.0, %v481
    %v483 = vpop.f32.mrf.mxu0
    %v484 = vpop.f32.mrf.mxu0
    %v485 = vadd.f32 0.0, %v484
    %v486 = vpop.f32.mrf.mxu0
    %487 = vmatprep.mubr.bf16.mxu0 0
    %488 = vmatmul.mubr.bf16.gmra.mxu0 %v434
    %v489 = vpop.f32.mrf.mxu0
    %v490 = vadd.f32 0.0, %v489
    %v491 = vpop.f32.mrf.mxu0
    %v492 = vpop.f32.mrf.mxu0
    %v493 = vadd.f32 0.0, %v492
    %v494 = vpop.f32.mrf.mxu0
    %495 = vmatprep.mubr.bf16.mxu0 0
    %496 = vmatmul.mubr.bf16.gmra.mxu0 %v437
    %v497 = vpop.f32.mrf.mxu0
    %v498 = vadd.f32 0.0, %v497
    %v499 = vpop.f32.mrf.mxu0
    %v500 = vpop.f32.mrf.mxu0
    %v501 = vadd.f32 0.0, %v500
    %v502 = vpop.f32.mrf.mxu0
    %503 = vdwg.mxu0
    %v504 = vpack.c.bf16 %v477, %v474
    %v505 = vpack.c.bf16 %v485, %v482
    %v506 = vpack.c.bf16 %v493, %v490
    %v507 = vpack.c.bf16 %v501, %v498
    %v508 = vmax.bf16 %v504, 0
    %v509 = vmax.bf16 %v505, 0
    %v510 = vmax.bf16 %v506, 0
    %v511 = vmax.bf16 %v507, 0
    %v512 = vld [vmem:[%s5] sm:$0xf]
    %v514 = vsel %vm200, %v512, 0
    %516 = vmatprep.subr.bf16.mxu0 0
    %517 = vmatpush1.bf16.msra.mxu0 0
    %518 = vmatprep.subr.bf16.mxu0 0
    %519 = vmatpush1.bf16.msra.mxu0 0
    %520 = vmatprep.subr.bf16.mxu0 0
    %521 = vmatpush1.bf16.msra.mxu0 0
    %522 = vmatprep.subr.bf16.mxu0 0
    %523 = vmatpush1.bf16.msra.mxu0 0
    %524 = vmatprep.subr.bf16.mxu0 0
    %525 = vmatpush1.bf16.msra.mxu0 %v511
    %526 = vmatprep.subr.bf16.mxu0 0
    %527 = vmatpush1.bf16.msra.mxu0 %v510
    %528 = vmatprep.subr.bf16.mxu0 0
    %529 = vmatpush1.bf16.msra.mxu0 %v509
    %530 = vmatprep.subr.bf16.mxu0 0
    %531 = vmatpush1.bf16.msra.mxu0 %v508
    %532 = vmatprep.subr.bf16.mxu0 0
    %533 = vmatpush2.bf16.msra.mxu0 0
    %534 = vmatprep.subr.bf16.mxu0 0
    %535 = vmatpush2.bf16.msra.mxu0 0
    %536 = vmatprep.subr.bf16.mxu0 0
    %537 = vmatpush2.bf16.msra.mxu0 0
    %538 = vmatprep.subr.bf16.mxu0 0
    %539 = vmatpush2.bf16.msra.mxu0 0
    %540 = vmatprep.subr.bf16.mxu0 0
    %541 = vmatpush2.bf16.msra.mxu0 0
    %542 = vmatprep.subr.bf16.mxu0 0
    %543 = vmatpush2.bf16.msra.mxu0 0
    %544 = vmatprep.subr.bf16.mxu0 0
    %545 = vmatpush2.bf16.msra.mxu0 0
    %546 = vmatprep.subr.bf16.mxu0 0
    %547 = vmatpush2.bf16.msra.mxu0 0
    %548 = vmatprep.mubr.bf16.mxu0 0
    %549 = vmatmul.mubr.bf16.gmra.mxu0 %v514
    %v550 = vpop.f32.mrf.mxu0
    %v551 = vadd.f32 0.0, %v550
    %v552 = vpop.f32.mrf.mxu0
    %v553 = vpop.f32.mrf.mxu0
    %v554 = vpop.f32.mrf.mxu0
    %555 = vdwg.mxu0
    %556 = vst [vmem:[#allocation7] sm:$0xff] %v551
    // Predicated region
    $region34: #{tpu_custom_call.1} parent=1 // pred_check
      _
    $region35: #{tpu_custom_call.1} parent=1 // pred_check_branch
      %558 = sbr.rel (0) target = $region37
    $region36: #{tpu_custom_call.1} parent=1 // pred_region
      %s560 = ssub.s32 128, 128
      %561 = vsyncadd [#allocation4], %s560
      %s563 = sshll.u32 [#allocation7], 4
      %s564 = int_to_ptr.vmem [resolvable:$true] %s563
      %566 = dma.vmem_to_hbm [thread:$0]  %s564, 128, %s6, [#allocation4]
    $region37: #{tpu_custom_call.1} parent=1 // pred_fallthru
      _
    // Predicated region
    $region38: #{tpu_custom_call.1} parent=1 // pred_check
      _
    $region39: #{tpu_custom_call.1} parent=1 // pred_check_branch
      %568 = sbr.rel (0) target = $region41
    $region40: #{tpu_custom_call.1} parent=1 // pred_region
      %569 = dma.done [#allocation4], 128
    $region41: #{tpu_custom_call.1} parent=1 // pred_fallthru
      _
    %570 = vsyncpa [#allocation3], 1
    %571 = vsyncpa [#allocation6], 1
    %572 = vsyncpa [#allocation4], 1

</llo_original>
